<compile_context>
chip_gen: v7x
topology: tpu7x:2x2x1
jax: 0.10.0
libtpu: 0.0.40
codegen_flags: <defaults>
</compile_context>

<pallas_src>
import functools

import jax
import jax.numpy as jnp
from jax.experimental import pallas as pl
from jax.experimental.pallas import tpu as pltpu

EPSILON = 1e-07


def _round_up(x, m):
    return ((x + m - 1) // m) * m


def _pick_col_tile(c_pad, max_tile=2048):
    """Largest multiple-of-128 tile <= max_tile that divides c_pad."""
    if c_pad <= max_tile:
        return c_pad
    for k in range(max_tile // 128, 0, -1):
        t = 128 * k
        if c_pad % t == 0:
            return t
    return 128


def _pick_row_tile(n, col_tile, budget_bytes=2 * 1024 * 1024, max_rows=2048):
    """Largest multiple-of-8 row tile with row_tile*col_tile*4B <= budget."""
    rows = budget_bytes // (col_tile * 4)
    rows = max(8, (rows // 8) * 8)
    rows = min(rows, max_rows)
    rows = min(rows, _round_up(n, 8))
    return rows


def _f1_kernel(yp_ref, yt_ref, o_ref, tp_acc, syp_acc, syt_acc):
    """Accumulate per-class tp / sum(yp) / sum(yt) over row tiles; finalize F1."""
    i = pl.program_id(1)  # row (reduction) axis is the innermost grid axis

    @pl.when(i == 0)
    def _():
        tp_acc[...] = jnp.zeros_like(tp_acc)
        syp_acc[...] = jnp.zeros_like(syp_acc)
        syt_acc[...] = jnp.zeros_like(syt_acc)

    yp = yp_ref[...].astype(jnp.float32)
    yt = yt_ref[...].astype(jnp.float32)

    rt, ct = yp.shape  # static block shape; rt is a multiple of 8
    # Fold row groups of 8 so the per-step accumulation is pure elementwise
    # vreg adds (VPU only); the cross-sublane reduction happens once at the end.
    yp3 = yp.reshape(rt // 8, 8, ct)
    yt3 = yt.reshape(rt // 8, 8, ct)

    tp_acc[...] += jnp.sum(yt3 * yp3, axis=0)
    syp_acc[...] += jnp.sum(yp3, axis=0)
    syt_acc[...] += jnp.sum(yt3, axis=0)

    @pl.when(i == pl.num_programs(1) - 1)
    def _():
        tp = jnp.sum(tp_acc[...], axis=0, keepdims=True)
        sum_yp = jnp.sum(syp_acc[...], axis=0, keepdims=True)
        sum_yt = jnp.sum(syt_acc[...], axis=0, keepdims=True)
        fp = sum_yp - tp
        fn = sum_yt - tp
        precision = tp / (tp + fp + EPSILON)
        recall = tp / (tp + fn + EPSILON)
        o_ref[...] = 2.0 * (precision * recall) / (precision + recall + EPSILON)


@jax.jit
def f1_score(y_pred, y_true):
    assert y_pred.ndim == 2
    assert y_pred.shape == y_true.shape
    n, c = y_pred.shape

    # Lane-dense classes: pad C to a multiple of 128, then pick a column tile.
    c_pad = _round_up(c, 128)
    col_tile = _pick_col_tile(c_pad)
    # Large row tiles sized against a ~2 MiB/f32 per-input-buffer budget
    # (2 inputs x 2 pipeline buffers ~ 8 MiB, fits v5e/v6e/v7x scoped VMEM).
    row_tile = _pick_row_tile(n, col_tile)
    n_pad = _round_up(n, row_tile)

    pad_r, pad_c = n_pad - n, c_pad - c
    if pad_r or pad_c:
        # Zero padding is exact: zero rows add nothing to tp / sum_yp / sum_yt;
        # padded class columns yield f1 == 0 and are sliced off below.
        y_pred = jnp.pad(y_pred, ((0, pad_r), (0, pad_c)))
        y_true = jnp.pad(y_true, ((0, pad_r), (0, pad_c)))

    grid = (c_pad // col_tile, n_pad // row_tile)

    out = pl.pallas_call(
        _f1_kernel,
        out_shape=jax.ShapeDtypeStruct((1, c_pad), jnp.float32),
        grid_spec=pltpu.PrefetchScalarGridSpec(
            num_scalar_prefetch=0,
            grid=grid,
            in_specs=[
                pl.BlockSpec((row_tile, col_tile), lambda j, i: (i, j)),
                pl.BlockSpec((row_tile, col_tile), lambda j, i: (i, j)),
            ],
            out_specs=pl.BlockSpec((1, col_tile), lambda j, i: (0, j)),
            scratch_shapes=[
                pltpu.VMEM((8, col_tile), jnp.float32),  # tp partials
                pltpu.VMEM((8, col_tile), jnp.float32),  # sum(y_pred) partials
                pltpu.VMEM((8, col_tile), jnp.float32),  # sum(y_true) partials
            ],
        ),
        compiler_params=pltpu.CompilerParams(
            # class axis independent (megacore-shardable on v7x); row axis is
            # the accumulation/reduction axis.
            dimension_semantics=("parallel", "arbitrary"),
            vmem_limit_bytes=32 * 1024 * 1024,
        ),
    )(y_pred, y_true)

    return out.reshape(c_pad)[:c]  # ndim == 1, like the PyTorch module


def _f1_ref(y_pred, y_true, epsilon=EPSILON):
    yp = y_pred.astype(jnp.float32)
    yt = y_true.astype(jnp.float32)
    tp = (yt * yp).sum(axis=0)
    fp = ((1 - yt) * yp).sum(axis=0)
    fn = (yt * (1 - yp)).sum(axis=0)
    precision = tp / (tp + fp + epsilon)
    recall = tp / (tp + fn + epsilon)
    return 2 * (precision * recall) / (precision + recall + epsilon)


if __name__ == "__main__":
    key = jax.random.PRNGKey(0)
    k1, k2 = jax.random.split(key)
    N, C = 16, 32  # small shapes: 16 samples, 32 classes
    y_pred = jax.random.uniform(k1, (N, C), dtype=jnp.float32)           # soft predictions in [0,1]
    y_true = (jax.random.uniform(k2, (N, C)) > 0.5).astype(jnp.float32)  # binary labels

    out = f1_score(y_pred, y_true)
    jax.block_until_ready(out)

    ref = _f1_ref(y_pred, y_true)
    assert out.shape == (C,) and out.dtype == jnp.float32
    assert jnp.allclose(out, ref, atol=1e-5, rtol=1e-5)
    print("KERNEL_OK")
</pallas_src>

<mosaic_0001>
module attributes {stable_mosaic.version = 11 : i64} {
  func.func @_f1_kernel(%arg0: i32, %arg1: i32, %arg2: memref<16x128xf32, #tpu.memory_space<vmem>>, %arg3: memref<16x128xf32, #tpu.memory_space<vmem>>, %arg4: memref<1x128xf32, #tpu.memory_space<vmem>>, %arg5: memref<8x128xf32, #tpu.memory_space<vmem>>, %arg6: memref<8x128xf32, #tpu.memory_space<vmem>>, %arg7: memref<8x128xf32, #tpu.memory_space<vmem>>) attributes {dimension_semantics = [#tpu.dimension_semantics<parallel>, #tpu.dimension_semantics<arbitrary>], iteration_bounds = array<i64: 1, 1>, scalar_prefetch = 0 : i64, scratch_operands = 3 : i64, tpu.core_type = #tpu.core_type<tc>, window_params = [{transform_indices = @transform_0, window_bounds = array<i64: 16, 128>}, {transform_indices = @transform_1, window_bounds = array<i64: 16, 128>}, {transform_indices = @transform_2, window_bounds = array<i64: 1, 128>}]} {
    %c0_i32 = arith.constant 0 : i32
    %0 = arith.cmpi eq, %arg1, %c0_i32 : i32
    %1 = arith.extui %0 : i1 to i32
    %c0_i32_0 = arith.constant 0 : i32
    %2 = arith.cmpi ne, %1, %c0_i32_0 : i32
    scf.if %2 {
      %cst_20 = arith.constant 0.000000e+00 : f32
      %23 = vector.broadcast %cst_20 : f32 to vector<8x128xf32>
      %c0_21 = arith.constant 0 : index
      %c0_22 = arith.constant 0 : index
      %24 = vector.load %arg5[%c0_21, %c0_22] : memref<8x128xf32, #tpu.memory_space<vmem>>, vector<8x128xf32>
      tpu.vector_store %arg5[%c0_21, %c0_22], %23 {strides = array<i32>} : memref<8x128xf32, #tpu.memory_space<vmem>>, vector<8x128xf32>,
      %cst_23 = arith.constant 0.000000e+00 : f32
      %25 = vector.broadcast %cst_23 : f32 to vector<8x128xf32>
      %c0_24 = arith.constant 0 : index
      %c0_25 = arith.constant 0 : index
      %26 = vector.load %arg6[%c0_24, %c0_25] : memref<8x128xf32, #tpu.memory_space<vmem>>, vector<8x128xf32>
      tpu.vector_store %arg6[%c0_24, %c0_25], %25 {strides = array<i32>} : memref<8x128xf32, #tpu.memory_space<vmem>>, vector<8x128xf32>,
      %cst_26 = arith.constant 0.000000e+00 : f32
      %27 = vector.broadcast %cst_26 : f32 to vector<8x128xf32>
      %c0_27 = arith.constant 0 : index
      %c0_28 = arith.constant 0 : index
      %28 = vector.load %arg7[%c0_27, %c0_28] : memref<8x128xf32, #tpu.memory_space<vmem>>, vector<8x128xf32>
      tpu.vector_store %arg7[%c0_27, %c0_28], %27 {strides = array<i32>} : memref<8x128xf32, #tpu.memory_space<vmem>>, vector<8x128xf32>,
    } else {
    }
    %c0 = arith.constant 0 : index
    %c0_1 = arith.constant 0 : index
    %3 = vector.load %arg2[%c0, %c0_1] : memref<16x128xf32, #tpu.memory_space<vmem>>, vector<16x128xf32>
    %c0_2 = arith.constant 0 : index
    %c0_3 = arith.constant 0 : index
    %4 = vector.load %arg3[%c0_2, %c0_3] : memref<16x128xf32, #tpu.memory_space<vmem>>, vector<16x128xf32>
    %5 = vector.shape_cast %3 : vector<16x128xf32> to vector<2x8x128xf32>
    %6 = vector.shape_cast %4 : vector<16x128xf32> to vector<2x8x128xf32>
    %c0_4 = arith.constant 0 : index
    %c0_5 = arith.constant 0 : index
    %7 = vector.load %arg5[%c0_4, %c0_5] : memref<8x128xf32, #tpu.memory_space<vmem>>, vector<8x128xf32>
    %8 = arith.mulf %6, %5 : vector<2x8x128xf32>
    %cst = arith.constant dense<0.000000e+00> : vector<8x128xf32>
    %9 = vector.multi_reduction <add>, %8, %cst [0] : vector<2x8x128xf32> to vector<8x128xf32>
    %10 = arith.addf %7, %9 : vector<8x128xf32>
    %c0_6 = arith.constant 0 : index
    %c0_7 = arith.constant 0 : index
    %11 = vector.load %arg5[%c0_6, %c0_7] : memref<8x128xf32, #tpu.memory_space<vmem>>, vector<8x128xf32>
    tpu.vector_store %arg5[%c0_6, %c0_7], %10 {strides = array<i32>} : memref<8x128xf32, #tpu.memory_space<vmem>>, vector<8x128xf32>,
    %c0_8 = arith.constant 0 : index
    %c0_9 = arith.constant 0 : index
    %12 = vector.load %arg6[%c0_8, %c0_9] : memref<8x128xf32, #tpu.memory_space<vmem>>, vector<8x128xf32>
    %cst_10 = arith.constant dense<0.000000e+00> : vector<8x128xf32>
    %13 = vector.multi_reduction <add>, %5, %cst_10 [0] : vector<2x8x128xf32> to vector<8x128xf32>
    %14 = arith.addf %12, %13 : vector<8x128xf32>
    %c0_11 = arith.constant 0 : index
    %c0_12 = arith.constant 0 : index
    %15 = vector.load %arg6[%c0_11, %c0_12] : memref<8x128xf32, #tpu.memory_space<vmem>>, vector<8x128xf32>
    tpu.vector_store %arg6[%c0_11, %c0_12], %14 {strides = array<i32>} : memref<8x128xf32, #tpu.memory_space<vmem>>, vector<8x128xf32>,
    %c0_13 = arith.constant 0 : index
    %c0_14 = arith.constant 0 : index
    %16 = vector.load %arg7[%c0_13, %c0_14] : memref<8x128xf32, #tpu.memory_space<vmem>>, vector<8x128xf32>
    %cst_15 = arith.constant dense<0.000000e+00> : vector<8x128xf32>
    %17 = vector.multi_reduction <add>, %6, %cst_15 [0] : vector<2x8x128xf32> to vector<8x128xf32>
    %18 = arith.addf %16, %17 : vector<8x128xf32>
    %c0_16 = arith.constant 0 : index
    %c0_17 = arith.constant 0 : index
    %19 = vector.load %arg7[%c0_16, %c0_17] : memref<8x128xf32, #tpu.memory_space<vmem>>, vector<8x128xf32>
    tpu.vector_store %arg7[%c0_16, %c0_17], %18 {strides = array<i32>} : memref<8x128xf32, #tpu.memory_space<vmem>>, vector<8x128xf32>,
    %c0_i32_18 = arith.constant 0 : i32
    %20 = arith.cmpi eq, %arg1, %c0_i32_18 : i32
    %21 = arith.extui %20 : i1 to i32
    %c0_i32_19 = arith.constant 0 : i32
    %22 = arith.cmpi ne, %21, %c0_i32_19 : i32
    scf.if %22 {
      %c0_20 = arith.constant 0 : index
      %c0_21 = arith.constant 0 : index
      %23 = vector.load %arg5[%c0_20, %c0_21] : memref<8x128xf32, #tpu.memory_space<vmem>>, vector<8x128xf32>
      %cst_22 = arith.constant dense<0.000000e+00> : vector<128xf32>
      %24 = vector.multi_reduction <add>, %23, %cst_22 [0] : vector<8x128xf32> to vector<128xf32>
      %25 = vector.shape_cast %24 : vector<128xf32> to vector<1x128xf32>
      %c0_23 = arith.constant 0 : index
      %c0_24 = arith.constant 0 : index
      %26 = vector.load %arg6[%c0_23, %c0_24] : memref<8x128xf32, #tpu.memory_space<vmem>>, vector<8x128xf32>
      %cst_25 = arith.constant dense<0.000000e+00> : vector<128xf32>
      %27 = vector.multi_reduction <add>, %26, %cst_25 [0] : vector<8x128xf32> to vector<128xf32>
      %28 = vector.shape_cast %27 : vector<128xf32> to vector<1x128xf32>
      %c0_26 = arith.constant 0 : index
      %c0_27 = arith.constant 0 : index
      %29 = vector.load %arg7[%c0_26, %c0_27] : memref<8x128xf32, #tpu.memory_space<vmem>>, vector<8x128xf32>
      %cst_28 = arith.constant dense<0.000000e+00> : vector<128xf32>
      %30 = vector.multi_reduction <add>, %29, %cst_28 [0] : vector<8x128xf32> to vector<128xf32>
      %31 = vector.shape_cast %30 : vector<128xf32> to vector<1x128xf32>
      %32 = arith.subf %28, %25 : vector<1x128xf32>
      %33 = arith.subf %31, %25 : vector<1x128xf32>
      %34 = arith.addf %25, %32 : vector<1x128xf32>
      %cst_29 = arith.constant 1.000000e-07 : f32
      %35 = vector.broadcast %cst_29 : f32 to vector<1x128xf32>
      %36 = arith.addf %34, %35 : vector<1x128xf32>
      %37 = arith.divf %25, %36 : vector<1x128xf32>
      %38 = arith.addf %25, %33 : vector<1x128xf32>
      %cst_30 = arith.constant 1.000000e-07 : f32
      %39 = vector.broadcast %cst_30 : f32 to vector<1x128xf32>
      %40 = arith.addf %38, %39 : vector<1x128xf32>
      %41 = arith.divf %25, %40 : vector<1x128xf32>
      %42 = arith.mulf %37, %41 : vector<1x128xf32>
      %cst_31 = arith.constant 2.000000e+00 : f32
      %43 = vector.broadcast %cst_31 : f32 to vector<1x128xf32>
      %44 = arith.mulf %43, %42 : vector<1x128xf32>
      %45 = arith.addf %37, %41 : vector<1x128xf32>
      %cst_32 = arith.constant 1.000000e-07 : f32
      %46 = vector.broadcast %cst_32 : f32 to vector<1x128xf32>
      %47 = arith.addf %45, %46 : vector<1x128xf32>
      %48 = arith.divf %44, %47 : vector<1x128xf32>
      %c0_33 = arith.constant 0 : index
      %c0_34 = arith.constant 0 : index
      %49 = vector.load %arg4[%c0_33, %c0_34] : memref<1x128xf32, #tpu.memory_space<vmem>>, vector<1x128xf32>
      tpu.vector_store %arg4[%c0_33, %c0_34], %48 {strides = array<i32>} : memref<1x128xf32, #tpu.memory_space<vmem>>, vector<1x128xf32>,
    } else {
    }
    return
  }
  func.func @transform_0(%arg0: i32, %arg1: i32) -> (i32, i32) {
    %c0_i32 = arith.constant 0 : i32
    return %arg1, %arg0 : i32, i32
  }
  func.func @transform_1(%arg0: i32, %arg1: i32) -> (i32, i32) {
    %c0_i32 = arith.constant 0 : i32
    return %arg1, %arg0 : i32, i32
  }
  func.func @transform_2(%arg0: i32, %arg1: i32) -> (i32, i32) {
    %c0_i32 = arith.constant 0 : i32
    %c0_i32_0 = arith.constant 0 : i32
    return %c0_i32, %arg0 : i32, i32
  }
}

</mosaic_0001>

<llo_original>
// kernel: f1_score.1
$region0: #{f1_score.1}
  #allocation0 [shape = 'u32[]', space=smem, size = 0x4, offset = 0x4, fixed_abs, tag = 'smem constant byte address 0x4 - core index']
  #allocation1 [shape = 'u32[144,128]{1,0:T(1,128)}', space=vmem, size = 0x12000, scoped, tag = 'internal scratch']
  #allocation2 [shape = 'f32[8,128]{1,0:T(8,128)}', space=vmem, size = 0x1000, scoped, tag = 'scratch operand']
  #allocation3 [shape = 'f32[8,128]{1,0:T(8,128)}', space=vmem, size = 0x1000, scoped, tag = 'scratch operand']
  #allocation4 [shape = 'f32[8,128]{1,0:T(8,128)}', space=vmem, size = 0x1000, scoped, tag = 'scratch operand']
  %s0 = inlined_call_operand.vmem [shape: f32[16,128], index: 0, kind: input, shape index: {}]
  %s1 = inlined_call_operand.vmem [shape: f32[16,128], index: 1, kind: input, shape index: {}]
  %s2 = inlined_call_operand.vmem [shape: f32[1,128], index: 2, kind: output, shape index: {}]
  %s3 = sld [smem:[#allocation0]]
  $region26: #{f1_score.1} parent=0
    _
  %s5 = ssub.s32 1, %s3
  %s6 = scalar_select 0, %s5, %s3
  // Predicated region
  $region2: #{f1_score.1} parent=0 // pred_check
    _
  $region3: #{f1_score.1} parent=0 // pred_check_branch
    %8 = sbr.rel (0) target = $region5
  $region4: #{f1_score.1} parent=0 // pred_region
    _
  $region5: #{f1_score.1} parent=0 // pred_fallthru
    _
  // Predicated region
  $region6: #{f1_score.1} parent=0 // pred_check
    _
  $region7: #{f1_score.1} parent=0 // pred_check_branch
    %10 = sbr.rel (0) target = $region9
  $region8: #{f1_score.1} parent=0 // pred_region
    _
  $region9: #{f1_score.1} parent=0 // pred_fallthru
    _
  %p11 = scmp.eq.s32.totalorder 0, 0
  // Predicated region
  $region10: #{f1_score.1} parent=0 // pred_check
    %p12 = pneg %p11
  $region11: #{f1_score.1} parent=0 // pred_check_branch
    %14 = sbr.rel (%p12) target = $region13
  $region12: #{f1_score.1} parent=0 // pred_region
    %15 = vst [vmem:[#allocation2] sm:$0xff] 0.0
    %16 = vst [vmem:[#allocation3] sm:$0xff] 0.0
    %17 = vst [vmem:[#allocation4] sm:$0xff] 0.0
  $region13: #{f1_score.1} parent=0 // pred_fallthru
    _
  %v18 = vld [vmem:[%s0] sm:$0xff]
  %v19 = vld [vmem:[%s0 + $0x8] sm:$0xff]
  %v20 = vld [vmem:[%s1] sm:$0xff]
  %v21 = vld [vmem:[%s1 + $0x8] sm:$0xff]
  %v22 = vld [vmem:[#allocation2] sm:$0xff]
  %v23 = vmul.f32 %v20, %v18
  %v24 = vmul.f32 %v21, %v19
  %v25 = vadd.f32 %v23, %v24
  %v26 = vadd.f32 %v22, %v25
  %27 = vst [vmem:[#allocation2] sm:$0xff] %v26
  %v28 = vld [vmem:[#allocation3] sm:$0xff]
  %v29 = vadd.f32 %v18, %v19
  %v30 = vadd.f32 %v28, %v29
  %31 = vst [vmem:[#allocation3] sm:$0xff] %v30
  %v32 = vld [vmem:[#allocation4] sm:$0xff]
  %v33 = vadd.f32 %v20, %v21
  %v34 = vadd.f32 %v32, %v33
  %35 = vst [vmem:[#allocation4] sm:$0xff] %v34
  // Predicated region
  $region14: #{f1_score.1} parent=0 // pred_check
    %p36 = pneg %p11
  $region15: #{f1_score.1} parent=0 // pred_check_branch
    %38 = sbr.rel (%p36) target = $region17
  $region16: #{f1_score.1} parent=0 // pred_region
    %v39 = vld [vmem:[#allocation2] sm:$0xff]
    %v40 = vrot.slane %v39, 4
    %v41 = vadd.f32 %v39, %v40
    %v42 = vrot.slane %v41, 2
    %v43 = vadd.f32 %v41, %v42
    %v44 = vrot.slane %v43, 1
    %v45 = vadd.f32 %v43, %v44
    %v46 = vld [vmem:[#allocation3] sm:$0xff]
    %v47 = vrot.slane %v46, 4
    %v48 = vadd.f32 %v46, %v47
    %v49 = vrot.slane %v48, 2
    %v50 = vadd.f32 %v48, %v49
    %v51 = vrot.slane %v50, 1
    %v52 = vadd.f32 %v50, %v51
    %v53 = vld [vmem:[#allocation4] sm:$0xff]
    %v54 = vrot.slane %v53, 4
    %v55 = vadd.f32 %v53, %v54
    %v56 = vrot.slane %v55, 2
    %v57 = vadd.f32 %v55, %v56
    %v58 = vrot.slane %v57, 1
    %v59 = vadd.f32 %v57, %v58
    %v60 = vsub.f32 %v52, %v45
    %v61 = vsub.f32 %v59, %v45
    %v62 = vadd.f32 %v45, %v60
    %v63 = vadd.f32 %v62, 1e-07
    %v64 = vrcp.pop %v63
    %v65 = vmul.f32 %v45, %v64
    %v66 = vadd.f32 %v45, %v61
    %v67 = vadd.f32 %v66, 1e-07
    %v68 = vrcp.pop %v67
    %v69 = vmul.f32 %v45, %v68
    %v70 = vmul.f32 %v65, %v69
    %v71 = vmul.f32 %v70, 2.0
    %v72 = vadd.f32 %v65, %v69
    %v73 = vadd.f32 %v72, 1e-07
    %v74 = vrcp.pop %v73
    %v75 = vmul.f32 %v71, %v74
    %76 = vst [vmem:[%s2] sm:$0x1] %v75
  $region17: #{f1_score.1} parent=0 // pred_fallthru
    _
  // Predicated region
  $region18: #{f1_score.1} parent=0 // pred_check
    _
  $region19: #{f1_score.1} parent=0 // pred_check_branch
    %78 = sbr.rel (0) target = $region21
  $region20: #{f1_score.1} parent=0 // pred_region
    _
  $region21: #{f1_score.1} parent=0 // pred_fallthru
    _
  // Predicated region
  $region22: #{f1_score.1} parent=0 // pred_check
    _
  $region23: #{f1_score.1} parent=0 // pred_check_branch
    %80 = sbr.rel (0) target = $region25
  $region24: #{f1_score.1} parent=0 // pred_region
    _
  $region25: #{f1_score.1} parent=0 // pred_fallthru
    _

</llo_original>
